<compile_context>
chip_gen: v7x
topology: tpu7x:2x2x1
jax: 0.10.0
libtpu: 0.0.40
codegen_flags: <defaults>
</compile_context>

<pallas_src>
import functools

import jax
import jax.numpy as jnp
import numpy as np
from jax import lax
from jax.experimental import pallas as pl
from jax.experimental.pallas import tpu as pltpu

IGNORE_INDEX = 255


def _ce2d_kernel(x_ref, t_ref, acc_ref, *, hw, tile_pixels, tiles_per_chunk,
                 needs_pix_mask, class_chunk):
    chunk_idx = pl.program_id(1)   # parallel pixel-chunk axis
    i = pl.program_id(2)           # reduction (tile-within-chunk) axis

    @pl.when(i == 0)
    def _():
        acc_ref[...] = jnp.zeros_like(acc_ref)

    C, TP = x_ref.shape
    t = t_ref[...].astype(jnp.int32)                      # (1, TP)

    if class_chunk is None:
        # ---- small C: fully vectorized over the class (sublane) axis ----
        x = x_ref[...]                                    # native dtype
        m = jnp.max(x, axis=0, keepdims=True)             # native dtype
        xm = (x - m).astype(jnp.float32)                  # only exp path in f32
        se = jnp.sum(jnp.exp(xm), axis=0, keepdims=True)  # (1, TP)
        cls = lax.broadcasted_iota(jnp.int32, (C, TP), 0)
        picked = jnp.sum(jnp.where(cls == t, xm, 0.0), axis=0, keepdims=True)
    else:
        # ---- large C: stream class chunks, keep temporaries in a few vregs ----
        CK = class_chunk
        n_full = C // CK
        rem = C - n_full * CK

        # pass 1: running max
        def max_body(c, m):
            c0 = pl.multiple_of(c * CK, CK)
            xc = x_ref[pl.ds(c0, CK), :].astype(jnp.float32)
            return jnp.maximum(m, jnp.max(xc, axis=0, keepdims=True))

        m = jnp.full((1, TP), -jnp.inf, dtype=jnp.float32)
        m = lax.fori_loop(0, n_full, max_body, m, unroll=True)
        if rem:
            xr = x_ref[pl.ds(n_full * CK, rem), :].astype(jnp.float32)
            m = jnp.maximum(m, jnp.max(xr, axis=0, keepdims=True))

        # pass 2: running sum-exp + running picked (reuse x - m for both)
        sub_iota = lax.broadcasted_iota(jnp.int32, (CK, TP), 0)

        def se_body(c, carry):
            se, picked = carry
            c0 = pl.multiple_of(c * CK, CK)
            xm = x_ref[pl.ds(c0, CK), :].astype(jnp.float32) - m
            se = se + jnp.sum(jnp.exp(xm), axis=0, keepdims=True)
            hit = sub_iota == (t - c * CK)
            picked = picked + jnp.sum(jnp.where(hit, xm, 0.0), axis=0,
                                      keepdims=True)
            return se, picked

        se0 = jnp.zeros((1, TP), jnp.float32)
        p0 = jnp.zeros((1, TP), jnp.float32)
        se, picked = lax.fori_loop(0, n_full, se_body, (se0, p0), unroll=True)
        if rem:
            xm = x_ref[pl.ds(n_full * CK, rem), :].astype(jnp.float32) - m
            se = se + jnp.sum(jnp.exp(xm), axis=0, keepdims=True)
            hit = lax.broadcasted_iota(jnp.int32, (rem, TP), 0) == (t - n_full * CK)
            picked = picked + jnp.sum(jnp.where(hit, xm, 0.0), axis=0,
                                      keepdims=True)

    # loss = lse - x[t] = (log(se) + m) - (picked + m) = log(se) - picked
    per_pixel = jnp.log(se) - picked                       # (1, TP) f32
    base_valid = t != IGNORE_INDEX                         # (1, TP) bool

    def _accum(valid):
        # single 2-sublane read-modify-write: row 0 = loss, row 1 = count
        contrib = jnp.concatenate(
            [jnp.where(valid, per_pixel, 0.0),             # select, NaN-safe
             valid.astype(jnp.float32)], axis=0)           # (2, TP)
        acc_ref[...] += contrib

    if needs_pix_mask:
        gi = chunk_idx * tiles_per_chunk + i               # global pixel tile
        full_tile = (gi + 1) * tile_pixels <= hw

        @pl.when(full_tile)
        def _():
            _accum(base_valid)

        @pl.when(jnp.logical_not(full_tile))
        def _():
            pix = gi * tile_pixels + lax.broadcasted_iota(jnp.int32, t.shape, 1)
            _accum(base_valid & (pix < hw))
    else:
        _accum(base_valid)


def cross_entropy_loss_2d(outputs, targets, *, tile_pixels=None, class_chunk=32):
    """outputs: [N, C, H, W] float; targets: [N, H, W] int (any int dtype).

    Returns scalar mean loss over non-ignored pixels (NaN if all ignored,
    matching PyTorch's size_average behavior)."""
    N, C, H, W = outputs.shape
    HW = H * W

    # NCHW is already class-major: pure (free) reshapes, no transpose, no pad.
    # Targets keep the caller's dtype (uint8/int8 labels stay narrow on HBM);
    # they are widened per-tile inside the kernel.
    logits = outputs.reshape(N, C, HW)
    tgt = targets.reshape(N, 1, HW)

    chunked = C >= 2 * class_chunk
    eff_class_chunk = class_chunk if chunked else None

    # Scoped-VMEM limit: half of physical, capped at 64 MiB
    # (v5e/v6e: 128 MiB phys -> 64 MiB; v7x: 64 MiB phys -> 32 MiB).
    try:
        phys_vmem = getattr(pltpu.get_tpu_info(), "vmem_capacity_bytes", None)
    except Exception:
        phys_vmem = None
    if not phys_vmem:
        phys_vmem = 64 * 1024 * 1024
    vmem_limit = min(phys_vmem // 2, 64 * 1024 * 1024)

    if tile_pixels is None:
        isz = jnp.dtype(outputs.dtype).itemsize
        if chunked:
            # double-buffered native logits block + a few CK-row f32 temps
            bytes_per_pixel = 2 * C * isz + 5 * class_chunk * 4 + 32
        else:
            # double-buffered native block + f32 temporaries (xm, exp, iota, sel)
            bytes_per_pixel = 2 * C * isz + 4 * C * 4 + 32
        budget = vmem_limit // 2                       # headroom for acc/targets
        tp = budget // max(1, bytes_per_pixel)
        tile_pixels = max(128, min(8192, (tp // 128) * 128))
    if HW <= tile_pixels:
        tile_pixels = HW            # block == full dim is always valid
    else:
        assert tile_pixels % 128 == 0, "lane tile must be a multiple of 128"
    num_tiles = pl.cdiv(HW, tile_pixels)

    # Second parallel axis over pixel chunks so v7x megacore can split work
    # even when N is small/odd.  Extra (clamped) tiles are fully masked.
    n_chunks = 2 if num_tiles >= 2 else 1
    tpc = pl.cdiv(num_tiles, n_chunks)
    needs_pix_mask = (n_chunks * tpc * tile_pixels != HW)

    if n_chunks * tpc == num_tiles:
        pix_map = lambda n, c, i, _t=tpc: (n, 0, c * _t + i)
    else:
        pix_map = lambda n, c, i, _t=tpc, _last=num_tiles - 1: (
            n, 0, jnp.minimum(c * _t + i, _last))

    kernel = functools.partial(
        _ce2d_kernel, hw=HW, tile_pixels=tile_pixels, tiles_per_chunk=tpc,
        needs_pix_mask=needs_pix_mask, class_chunk=eff_class_chunk)

    acc = pl.pallas_call(
        kernel,
        out_shape=jax.ShapeDtypeStruct((N, n_chunks, 2, tile_pixels), jnp.float32),
        grid_spec=pltpu.PrefetchScalarGridSpec(
            num_scalar_prefetch=0,
            grid=(N, n_chunks, tpc),
            in_specs=[
                pl.BlockSpec((pl.Squeezed(), C, tile_pixels), pix_map),
                pl.BlockSpec((pl.Squeezed(), 1, tile_pixels), pix_map),
            ],
            out_specs=pl.BlockSpec(
                (pl.Squeezed(), pl.Squeezed(), 2, tile_pixels),
                lambda n, c, i: (n, c, 0, 0)),
        ),
        compiler_params=pltpu.CompilerParams(
            dimension_semantics=("parallel", "parallel", "arbitrary"),
            vmem_limit_bytes=vmem_limit,
        ),
    )(logits, tgt)

    sums = jnp.sum(acc, axis=(0, 1, 3))        # (2,): [loss_sum, valid_count]
    # size_average=True -> mean over non-ignored pixels.
    # NOTE: if every pixel is ignored this is 0/0 = NaN (PyTorch contract).
    return (sums[0] / sums[1]).astype(outputs.dtype)


def _reference(outputs, targets):
    # pure-JAX reference for validation
    logp = jax.nn.log_softmax(outputs.astype(jnp.float32), axis=1)  # (N,C,H,W)
    t = targets.astype(jnp.int32)
    valid = t != IGNORE_INDEX
    t_safe = jnp.where(valid, t, 0)
    picked = jnp.take_along_axis(logp, t_safe[:, None, :, :], axis=1)[:, 0]
    loss = jnp.where(valid, -picked, 0.0)
    return jnp.sum(loss) / jnp.sum(valid.astype(jnp.float32))


if __name__ == "__main__":
    key = jax.random.PRNGKey(0)
    k1, k2, k3, k4, k5, k6 = jax.random.split(key, 6)

    # ---- test 1: small shapes, vectorized small-C path, single tile ----
    N, C, H, W = 2, 4, 16, 16
    outputs = jax.random.normal(k1, (N, C, H, W), dtype=jnp.float32)
    targets = jax.random.randint(k2, (N, H, W), 0, C, dtype=jnp.int32)
    ignore_mask = jax.random.bernoulli(k3, 0.1, (N, H, W))
    targets = jnp.where(ignore_mask, IGNORE_INDEX, targets)

    loss = jax.block_until_ready(cross_entropy_loss_2d(outputs, targets))
    ref = jax.block_until_ready(_reference(outputs, targets))
    np.testing.assert_allclose(np.asarray(loss), np.asarray(ref),
                               rtol=1e-5, atol=1e-5)

    # ---- test 2: large-C class-chunk streaming + multi-tile + ragged tail
    #              + clamped (fully-masked) tiles on the parallel chunk axis ----
    N2, C2, H2, W2 = 1, 100, 24, 24
    outputs2 = jax.random.normal(k4, (N2, C2, H2, W2), dtype=jnp.float32)
    targets2 = jax.random.randint(k5, (N2, H2, W2), 0, C2, dtype=jnp.int32)
    ignore2 = jax.random.bernoulli(k6, 0.1, (N2, H2, W2))
    targets2 = jnp.where(ignore2, IGNORE_INDEX, targets2)

    loss2 = jax.block_until_ready(
        cross_entropy_loss_2d(outputs2, targets2, tile_pixels=256, class_chunk=32))
    ref2 = jax.block_until_ready(_reference(outputs2, targets2))
    np.testing.assert_allclose(np.asarray(loss2), np.asarray(ref2),
                               rtol=1e-4, atol=1e-4)

    print("KERNEL_OK")
</pallas_src>

<mosaic_0001>
module attributes {stable_mosaic.version = 11 : i64} {
  func.func @_ce2d_kernel(%arg0: i32, %arg1: i32, %arg2: i32, %arg3: memref<1x4x256xf32, #tpu.memory_space<vmem>>, %arg4: memref<1x1x256xi32, #tpu.memory_space<vmem>>, %arg5: memref<1x1x2x256xf32, #tpu.memory_space<vmem>>) attributes {dimension_semantics = [#tpu.dimension_semantics<parallel>, #tpu.dimension_semantics<parallel>, #tpu.dimension_semantics<arbitrary>], iteration_bounds = array<i64: 2, 1, 1>, scalar_prefetch = 0 : i64, scratch_operands = 0 : i64, tpu.core_type = #tpu.core_type<tc>, window_params = [{transform_indices = @transform_0, window_bounds = array<i64: 1, 4, 256>}, {transform_indices = @transform_1, window_bounds = array<i64: 1, 1, 256>}, {transform_indices = @transform_2, window_bounds = array<i64: 1, 1, 2, 256>}]} {
    %c0_i32 = arith.constant 0 : i32
    %0 = arith.cmpi eq, %arg2, %c0_i32 : i32
    %1 = arith.extui %0 : i1 to i32
    %c0_i32_0 = arith.constant 0 : i32
    %2 = arith.cmpi ne, %1, %c0_i32_0 : i32
    scf.if %2 {
      %cst_18 = arith.constant 0.000000e+00 : f32
      %36 = vector.broadcast %cst_18 : f32 to vector<2x256xf32>
      %c0_19 = arith.constant 0 : index
      %c0_20 = arith.constant 0 : index
      %c0_21 = arith.constant 0 : index
      %c0_22 = arith.constant 0 : index
      %37 = vector.load %arg5[%c0_19, %c0_20, %c0_21, %c0_22] : memref<1x1x2x256xf32, #tpu.memory_space<vmem>>, vector<1x1x2x256xf32>
      %38 = vector.shape_cast %37 : vector<1x1x2x256xf32> to vector<2x256xf32>
      %39 = vector.shape_cast %36 : vector<2x256xf32> to vector<1x1x2x256xf32>
      tpu.vector_store %arg5[%c0_19, %c0_20, %c0_21, %c0_22], %39 {strides = array<i32>} : memref<1x1x2x256xf32, #tpu.memory_space<vmem>>, vector<1x1x2x256xf32>,
    } else {
    }
    %c0 = arith.constant 0 : index
    %c0_1 = arith.constant 0 : index
    %c0_2 = arith.constant 0 : index
    %3 = vector.load %arg4[%c0, %c0_1, %c0_2] : memref<1x1x256xi32, #tpu.memory_space<vmem>>, vector<1x1x256xi32>
    %4 = vector.shape_cast %3 : vector<1x1x256xi32> to vector<1x256xi32>
    %c0_3 = arith.constant 0 : index
    %c0_4 = arith.constant 0 : index
    %c0_5 = arith.constant 0 : index
    %5 = vector.load %arg3[%c0_3, %c0_4, %c0_5] : memref<1x4x256xf32, #tpu.memory_space<vmem>>, vector<1x4x256xf32>
    %6 = vector.shape_cast %5 : vector<1x4x256xf32> to vector<4x256xf32>
    %cst = arith.constant dense<0xFF800000> : vector<256xf32>
    %7 = vector.multi_reduction <maximumf>, %6, %cst [0] : vector<4x256xf32> to vector<256xf32>
    %8 = vector.shape_cast %7 : vector<256xf32> to vector<1x256xf32>
    %9 = vector.broadcast %8 : vector<1x256xf32> to vector<4x256xf32>
    %10 = arith.subf %6, %9 : vector<4x256xf32>
    %11 = math.exp %10 : vector<4x256xf32>
    %cst_6 = arith.constant dense<0.000000e+00> : vector<256xf32>
    %12 = vector.multi_reduction <add>, %11, %cst_6 [0] : vector<4x256xf32> to vector<256xf32>
    %13 = vector.shape_cast %12 : vector<256xf32> to vector<1x256xf32>
    %14 = tpu.iota {dimensions = array<i32: 0>} : vector<4x256xi32>
    %15 = vector.broadcast %4 : vector<1x256xi32> to vector<4x256xi32>
    %16 = arith.cmpi eq, %14, %15 : vector<4x256xi32>
    %cst_7 = arith.constant 0.000000e+00 : f32
    %17 = vector.broadcast %cst_7 : f32 to vector<4x256xf32>
    %18 = arith.select %16, %10, %17 : vector<4x256xi1>, vector<4x256xf32>
    %cst_8 = arith.constant dense<0.000000e+00> : vector<256xf32>
    %19 = vector.multi_reduction <add>, %18, %cst_8 [0] : vector<4x256xf32> to vector<256xf32>
    %20 = vector.shape_cast %19 : vector<256xf32> to vector<1x256xf32>
    %21 = math.log %13 : vector<1x256xf32>
    %22 = arith.subf %21, %20 : vector<1x256xf32>
    %c255_i32 = arith.constant 255 : i32
    %23 = vector.broadcast %c255_i32 : i32 to vector<1x256xi32>
    %24 = arith.cmpi ne, %4, %23 : vector<1x256xi32>
    %cst_9 = arith.constant 0.000000e+00 : f32
    %25 = vector.broadcast %cst_9 : f32 to vector<1x256xf32>
    %26 = arith.select %24, %22, %25 : vector<1x256xi1>, vector<1x256xf32>
    %27 = arith.extui %24 : vector<1x256xi1> to vector<1x256xi32>
    %28 = arith.sitofp %27 : vector<1x256xi32> to vector<1x256xf32>
    %29 = tpu.concatenate %26, %28 in 0 : vector<1x256xf32>, vector<1x256xf32> -> vector<2x256xf32>
    %c0_10 = arith.constant 0 : index
    %c0_11 = arith.constant 0 : index
    %c0_12 = arith.constant 0 : index
    %c0_13 = arith.constant 0 : index
    %30 = vector.load %arg5[%c0_10, %c0_11, %c0_12, %c0_13] : memref<1x1x2x256xf32, #tpu.memory_space<vmem>>, vector<1x1x2x256xf32>
    %31 = vector.shape_cast %30 : vector<1x1x2x256xf32> to vector<2x256xf32>
    %32 = arith.addf %31, %29 : vector<2x256xf32>
    %c0_14 = arith.constant 0 : index
    %c0_15 = arith.constant 0 : index
    %c0_16 = arith.constant 0 : index
    %c0_17 = arith.constant 0 : index
    %33 = vector.load %arg5[%c0_14, %c0_15, %c0_16, %c0_17] : memref<1x1x2x256xf32, #tpu.memory_space<vmem>>, vector<1x1x2x256xf32>
    %34 = vector.shape_cast %33 : vector<1x1x2x256xf32> to vector<2x256xf32>
    %35 = vector.shape_cast %32 : vector<2x256xf32> to vector<1x1x2x256xf32>
    tpu.vector_store %arg5[%c0_14, %c0_15, %c0_16, %c0_17], %35 {strides = array<i32>} : memref<1x1x2x256xf32, #tpu.memory_space<vmem>>, vector<1x1x2x256xf32>,
    return
  }
  func.func @transform_0(%arg0: i32, %arg1: i32, %arg2: i32) -> (i32, i32, i32) {
    %c1_i32 = arith.constant 1 : i32
    %0 = arith.muli %arg1, %c1_i32 : i32
    %1 = arith.addi %0, %arg2 : i32
    %c0_i32 = arith.constant 0 : i32
    %c0_i32_0 = arith.constant 0 : i32
    return %arg0, %c0_i32, %1 : i32, i32, i32
  }
  func.func @transform_1(%arg0: i32, %arg1: i32, %arg2: i32) -> (i32, i32, i32) {
    %c1_i32 = arith.constant 1 : i32
    %0 = arith.muli %arg1, %c1_i32 : i32
    %1 = arith.addi %0, %arg2 : i32
    %c0_i32 = arith.constant 0 : i32
    %c0_i32_0 = arith.constant 0 : i32
    return %arg0, %c0_i32, %1 : i32, i32, i32
  }
  func.func @transform_2(%arg0: i32, %arg1: i32, %arg2: i32) -> (i32, i32, i32, i32) {
    %c0_i32 = arith.constant 0 : i32
    %c0_i32_0 = arith.constant 0 : i32
    %c0_i32_1 = arith.constant 0 : i32
    return %arg0, %arg1, %c0_i32, %c0_i32_0 : i32, i32, i32, i32
  }
}

</mosaic_0001>

<llo_original>
// kernel: tpu_custom_call.1
$region0: #{tpu_custom_call.1}
  #allocation0 [shape = 'u32[]', space=smem, size = 0x4, offset = 0x4, fixed_abs, tag = 'smem constant byte address 0x4 - core index']
  #allocation1 [shape = 'u32[144,128]{1,0:T(1,128)}', space=vmem, size = 0x12000, scoped, tag = 'internal scratch']
  %s0 = inlined_call_operand.hbm [shape: f32[2,4,256], index: 0, kind: input, shape index: {}]
  %s1 = inlined_call_operand.hbm [shape: s32[2,1,256], index: 1, kind: input, shape index: {}]
  %s2 = inlined_call_operand.hbm [shape: f32[2,1,2,256], index: 2, kind: output, shape index: {}]
  %s3 = sld [smem:[#allocation0]]
  $region53: #{tpu_custom_call.1} parent=0
    _
  %s5 = ssub.s32 1, %s3
  %s6 = scalar_select 0, %s5, %s3
  $region1: #{tpu_custom_call.1} parent=0
    #allocation2 [shape = 'u8[8192]{0}', space=vmem, size = 0x2000, scoped, tag = 'input window, operand 0']
    #allocation3 [shape = 's32[2]{0}', space=sflag, size = 0x8, scoped, tag = 'scoped memory for tpu_custom_call.1']
    #allocation4 [shape = 's32[2]{0}', space=sflag, size = 0x8, scoped, tag = 'scoped memory for tpu_custom_call.1']
    #allocation5 [shape = 'u8[2048]{0}', space=vmem, size = 0x800, scoped, tag = 'input window, operand 1']
    #allocation6 [shape = 's32[2]{0}', space=sflag, size = 0x8, scoped, tag = 'scoped memory for tpu_custom_call.1']
    #allocation7 [shape = 'u8[4096]{0}', space=vmem, size = 0x1000, scoped, tag = 'output window, operand 0']
    %7 = vsyncpa [#allocation3], 0
    %s8 = scalar_lea.sflag [#allocation3], 1
    %9 = vsyncpa %s8, 0
    %10 = vsyncpa [#allocation6], 0
    %s11 = scalar_lea.sflag [#allocation6], 1
    %12 = vsyncpa %s11, 0
    %13 = vsyncpa [#allocation4], 0
    %s14 = scalar_lea.sflag [#allocation4], 1
    %15 = vsyncpa %s14, 0
    loop: start=0, step=1, limit=4
    $region2: #{tpu_custom_call.1} parent=1 // loop_pre_header
      _
    $region3: #{tpu_custom_call.1} parent=1 // loop_header
      %s17 = sphi 0, %s21
      %p18 = scmp.ge.s32.totalorder %s17, 4
      %s24 = sphi 0, %s43
      %s25 = sphi 0, %s39
      %s26 = sphi 0, %s35
      %s27 = sphi 0, %s24
      %s28 = sphi 0, %s25
      %s29 = sphi 0, %s26
      %s30 = sphi 0, %s27
      %s31 = sphi 0, %s28
      %s32 = sphi 0, %s29
      %s50 = sphi 0, %s52
      %s53 = sphi 0, %s50
      %s54 = sphi 0, %s53
      %s70 = sphi 0, %s54
      %s80 = sphi 0, %s82
      %s83 = sphi 0, %s80
      %s84 = sphi 0, %s83
      %s100 = sphi 0, %s84
      %s108 = sphi 0, %s110
      %s111 = sphi 0, %s108
      %s112 = sphi 0, %s111
      %s128 = sphi 0, %s112
    $region4: #{tpu_custom_call.1} parent=1 // loop_header_branch
      %20 = sbr.rel (%p18) target = $region8
    $region5: #{tpu_custom_call.1} parent=1 // loop_body
      %s22 = ssub.s32 %s17, 1
      %s23 = ssub.s32 %s17, 2
      %s33 = sadd.s32 1, %s26
      %p34 = scmp.ge.s32.totalorder %s33, 1
      %s35 = scalar_select %p34, 0, %s33
      %s36 = sadd.s32 1, %s25
      %s37 = scalar_select %p34, %s36, %s25
      %p38 = scmp.ge.s32.totalorder %s37, 1
      %s39 = scalar_select %p38, 0, %s37
      %s40 = sadd.s32 1, %s24
      %s41 = scalar_select %p38, %s40, %s24
      %p42 = scmp.ge.s32.totalorder %s41, 2
      %s43 = scalar_select %p42, 0, %s41
      %s44 = sadd.s32 %s25, %s26
      %s45 = sadd.s32 %s39, %s35
      %s46 = ssub.s32 %s24, %s43
      %s47 = ssub.s32 %s44, %s45
      %s48 = sor.u32 %s46, %s47
      %p49 = scmp.eq.s32.totalorder %s48, 0
      %s51 = sadd.s32 %s50, 1
      %s52 = scalar_select %p49, %s50, %s51
      %p55 = pneg %p49
      %p56 = scmp.eq.s32.totalorder %s17, 1
      %p57 = por %p55, %p56
      %p58 = scmp.ne.s32.totalorder %s50, %s53
      %p59 = scmp.eq.s32.totalorder %s17, 0
      %p60 = por %p58, %p59
      %p61 = scmp.ne.s32.totalorder %s50, %s53
      %p62 = scmp.eq.s32.totalorder %s22, 1
      %p63 = por %p61, %p62
      %p64 = scmp.ne.s32.totalorder %s53, %s54
      %p65 = scmp.eq.s32.totalorder %s22, 0
      %p66 = por %p64, %p65
      %p67 = scmp.ne.s32.totalorder %s53, %s54
      %p68 = scmp.eq.s32.totalorder %s23, 1
      %p69 = por %p67, %p68
      %p71 = scmp.ne.s32.totalorder %s54, %s70
      %p72 = scmp.eq.s32.totalorder %s23, 0
      %p73 = por %p71, %p72
      %s74 = sadd.s32 %s25, %s26
      %s75 = sadd.s32 %s39, %s35
      %s76 = ssub.s32 %s24, %s43
      %s77 = ssub.s32 %s74, %s75
      %s78 = sor.u32 %s76, %s77
      %p79 = scmp.eq.s32.totalorder %s78, 0
      %s81 = sadd.s32 %s80, 1
      %s82 = scalar_select %p79, %s80, %s81
      %p85 = pneg %p79
      %p86 = scmp.eq.s32.totalorder %s17, 1
      %p87 = por %p85, %p86
      %p88 = scmp.ne.s32.totalorder %s80, %s83
      %p89 = scmp.eq.s32.totalorder %s17, 0
      %p90 = por %p88, %p89
      %p91 = scmp.ne.s32.totalorder %s80, %s83
      %p92 = scmp.eq.s32.totalorder %s22, 1
      %p93 = por %p91, %p92
      %p94 = scmp.ne.s32.totalorder %s83, %s84
      %p95 = scmp.eq.s32.totalorder %s22, 0
      %p96 = por %p94, %p95
      %p97 = scmp.ne.s32.totalorder %s83, %s84
      %p98 = scmp.eq.s32.totalorder %s23, 1
      %p99 = por %p97, %p98
      %p101 = scmp.ne.s32.totalorder %s84, %s100
      %p102 = scmp.eq.s32.totalorder %s23, 0
      %p103 = por %p101, %p102
      %s104 = ssub.s32 %s24, %s43
      %s105 = ssub.s32 %s25, %s39
      %s106 = sor.u32 %s104, %s105
      %p107 = scmp.eq.s32.totalorder %s106, 0
      %s109 = sadd.s32 %s108, 1
      %s110 = scalar_select %p107, %s108, %s109
      %p113 = pneg %p107
      %p114 = scmp.eq.s32.totalorder %s17, 1
      %p115 = por %p113, %p114
      %p116 = scmp.ne.s32.totalorder %s108, %s111
      %p117 = scmp.eq.s32.totalorder %s17, 0
      %p118 = por %p116, %p117
      %p119 = scmp.ne.s32.totalorder %s108, %s111
      %p120 = scmp.eq.s32.totalorder %s22, 1
      %p121 = por %p119, %p120
      %p122 = scmp.ne.s32.totalorder %s111, %s112
      %p123 = scmp.eq.s32.totalorder %s22, 0
      %p124 = por %p122, %p123
      %p125 = scmp.ne.s32.totalorder %s111, %s112
      %p126 = scmp.eq.s32.totalorder %s23, 1
      %p127 = por %p125, %p126
      %p129 = scmp.ne.s32.totalorder %s112, %s128
      %p130 = scmp.eq.s32.totalorder %s23, 0
      %p131 = por %p129, %p130
      %p132 = scmp.le.s32.totalorder 1, %s17
      %p133 = scmp.lt.s32.totalorder %s17, 3
      %p134 = pnand %p132, %p133
      %p135 = pneg %p134
      // Predicated region
      $region9: #{tpu_custom_call.1} parent=5 // pred_check
        _
      $region10: #{tpu_custom_call.1} parent=5 // pred_check_branch
        %137 = sbr.rel (%p134) target = $region12
      $region11: #{tpu_custom_call.1} parent=5 // pred_region
        %s138 = ssub.s32 %s17, 1
      $region12: #{tpu_custom_call.1} parent=5 // pred_fallthru
        _
      %p139 = scmp.lt.s32.totalorder %s17, 2
      // Predicated region
      $region13: #{tpu_custom_call.1} parent=5 // pred_check
        %p140 = pneg %p139
      $region14: #{tpu_custom_call.1} parent=5 // pred_check_branch
        %142 = sbr.rel (%p140) target = $region16
      $region15: #{tpu_custom_call.1} parent=5 // pred_region
        // Predicated region
        $region17: #{tpu_custom_call.1} parent=15 // pred_check
          %p143 = pneg %p60
        $region18: #{tpu_custom_call.1} parent=15 // pred_check_branch
          %145 = sbr.rel (%p143) target = $region20
        $region19: #{tpu_custom_call.1} parent=15 // pred_region
          %s146 = sand.u32 %s50, 1
          %s147 = scalar_lea.sflag [#allocation3], %s146
          %s148 = sand.u32 %s50, 1
          %s149 = smul.addr %s148, 8
          %s150 = scalar_lea.vmem [#allocation2], %s149
          %s151 = sadd.s32 %s25, %s26
          %s152 = smul.u32 2, %s151
          %s154 = ssub.s32 128, 128
          %155 = vsyncadd %s147, %s154
          %s156 = smul.addr %s24, 2
          %s157 = sadd.s32 %s152, %s156
          %s158 = smul.addr %s157, 64
          %s159 = scalar_lea.hbm %s0, %s158
          %s161 = sshll.u32 %s150, 4
          %s162 = int_to_ptr.vmem [resolvable:$true] %s161
          %164 = dma.hbm_to_vmem [thread:$0]  %s159, 128, %s162, %s147
        $region20: #{tpu_custom_call.1} parent=15 // pred_fallthru
          _
        // Predicated region
        $region21: #{tpu_custom_call.1} parent=15 // pred_check
          %p165 = pneg %p90
        $region22: #{tpu_custom_call.1} parent=15 // pred_check_branch
          %167 = sbr.rel (%p165) target = $region24
        $region23: #{tpu_custom_call.1} parent=15 // pred_region
          %s168 = sand.u32 %s80, 1
          %s169 = scalar_lea.sflag [#allocation6], %s168
          %s170 = sand.u32 %s80, 1
          %s171 = smul.addr %s170, 2
          %s172 = scalar_lea.vmem [#allocation5], %s171
          %s173 = sadd.s32 %s25, %s26
          %s174 = smul.u32 2, %s173
          %s176 = ssub.s32 32, 32
          %177 = vsyncadd %s169, %s176
          %s178 = smul.addr %s24, 2
          %s179 = sadd.s32 %s174, %s178
          %s180 = smul.addr %s179, 16
          %s181 = scalar_lea.hbm %s1, %s180
          %s183 = sshll.u32 %s172, 4
          %s184 = int_to_ptr.vmem [resolvable:$true] %s183
          %186 = dma.hbm_to_vmem [thread:$0]  %s181, 32, %s184, %s169
        $region24: #{tpu_custom_call.1} parent=15 // pred_fallthru
          _
      $region16: #{tpu_custom_call.1} parent=5 // pred_fallthru
        _
      %p187 = scmp.le.s32.totalorder 1, %s17
      %p188 = scmp.lt.s32.totalorder %s17, 3
      %p189 = pnand %p187, %p188
      %p190 = pneg %p189
      // Predicated region
      $region25: #{tpu_custom_call.1} parent=5 // pred_check
        _
      $region26: #{tpu_custom_call.1} parent=5 // pred_check_branch
        %192 = sbr.rel (%p189) target = $region28
      $region27: #{tpu_custom_call.1} parent=5 // pred_region
        %s193 = ssub.s32 %s17, 1
        %s194 = sand.u32 %s53, 1
        %s195 = scalar_lea.sflag [#allocation3], %s194
        %s196 = sand.u32 %s53, 1
        %s197 = smul.addr %s196, 8
        %s198 = scalar_lea.vmem [#allocation2], %s197
        // Predicated region
        $region29: #{tpu_custom_call.1} parent=27 // pred_check
          %p199 = pneg %p66
        $region30: #{tpu_custom_call.1} parent=27 // pred_check_branch
          %201 = sbr.rel (%p199) target = $region32
        $region31: #{tpu_custom_call.1} parent=27 // pred_region
          %202 = dma.done %s195, 128
        $region32: #{tpu_custom_call.1} parent=27 // pred_fallthru
          _
        %s203 = sand.u32 %s83, 1
        %s204 = scalar_lea.sflag [#allocation6], %s203
        %s205 = sand.u32 %s83, 1
        %s206 = smul.addr %s205, 2
        %s207 = scalar_lea.vmem [#allocation5], %s206
        // Predicated region
        $region33: #{tpu_custom_call.1} parent=27 // pred_check
          %p208 = pneg %p96
        $region34: #{tpu_custom_call.1} parent=27 // pred_check_branch
          %210 = sbr.rel (%p208) target = $region36
        $region35: #{tpu_custom_call.1} parent=27 // pred_region
          %211 = dma.done %s204, 32
        $region36: #{tpu_custom_call.1} parent=27 // pred_fallthru
          _
        %s212 = sand.u32 %s53, 1
        %s213 = scalar_lea.sflag [#allocation3], %s212
        %s214 = sand.u32 %s53, 1
        %s215 = smul.addr %s214, 8
        %s216 = scalar_lea.vmem [#allocation2], %s215
        %p217 = pneg %p66
        %p218 = pneg %p63
        %s219 = sand.u32 %s83, 1
        %s220 = scalar_lea.sflag [#allocation6], %s219
        %s221 = sand.u32 %s83, 1
        %s222 = smul.addr %s221, 2
        %s223 = scalar_lea.vmem [#allocation5], %s222
        %p224 = pneg %p96
        %p225 = pneg %p93
        %p226 = pneg %p124
        %p227 = pneg %p121
        %s228 = sand.u32 %s111, 1
        %s229 = scalar_lea.sflag [#allocation4], %s228
        %s230 = sand.u32 %s111, 1
        %s231 = smul.addr %s230, 4
        %s232 = scalar_lea.vmem [#allocation7], %s231
        %s233 = sadd.s32 %s28, %s29
        %s234 = smul.u32 2, %s233
        %s235 = sadd.s32 %s28, %s29
        %s236 = smul.u32 2, %s235
        %p237 = scmp.eq.s32.totalorder %s29, 0
        // Predicated region
        $region37: #{tpu_custom_call.1} parent=27 // pred_check
          %p238 = pneg %p237
        $region38: #{tpu_custom_call.1} parent=27 // pred_check_branch
          %240 = sbr.rel (%p238) target = $region40
        $region39: #{tpu_custom_call.1} parent=27 // pred_region
          %241 = vst [vmem:[%s232] sm:$0xf] 0.0
        $region40: #{tpu_custom_call.1} parent=27 // pred_fallthru
          _
        %v242 = vld [vmem:[%s207] sm:$0x3]
        %v243 = vld [vmem:[%s198] sm:$0xff]
        %v245 = vcombine.high %v243, %v243
        %vm247 = vcmask 1043456
        %v248 = vsel %vm247, %v243, -inf
        %v249 = vrot.slane %v248, 4
        %v250 = vmax.f32 %v248, %v249
        %v251 = vrot.slane %v250, 2
        %v252 = vmax.f32 %v250, %v251
        %v253 = vrot.slane %v252, 1
        %v254 = vmax.f32 %v252, %v253
        %v255 = vsel %vm247, %v245, -inf
        %v256 = vrot.slane %v255, 4
        %v257 = vmax.f32 %v255, %v256
        %v258 = vrot.slane %v257, 2
        %v259 = vmax.f32 %v257, %v258
        %v260 = vrot.slane %v259, 1
        %v261 = vmax.f32 %v259, %v260
        %v264 = vcombine.low %v254, %v261
        %v266 = vsub.f32 %v243, %v264
        %v267 = vmul.f32 %v266, 1.442695
        %v268 = vpow.pop %v267
        %v270 = vcombine.high %v268, %v268
        %v272 = vsel %vm247, %v268, 0.0
        %v273 = vrot.slane %v272, 4
        %v274 = vadd.f32 %v272, %v273
        %v275 = vrot.slane %v274, 2
        %v276 = vadd.f32 %v274, %v275
        %v277 = vrot.slane %v276, 1
        %v278 = vadd.f32 %v276, %v277
        %v279 = vsel %vm247, %v270, 0.0
        %v280 = vrot.slane %v279, 4
        %v281 = vadd.f32 %v279, %v280
        %v282 = vrot.slane %v281, 2
        %v283 = vadd.f32 %v281, %v282
        %v284 = vrot.slane %v283, 1
        %v285 = vadd.f32 %v283, %v284
        %v286 = vlaneseq
        %v287 = vshrl.u32 %v286, 7
        %v288 = vlaneseq
        %v289 = vshrl.u32 %v288, 7
        %v290 = vsub.s32 0, %v289
        %v291 = vrot.slane %v242, %v290
        %v292 = vlaneseq
        %v293 = vshrl.u32 %v292, 7
        %v294 = vsub.s32 1, %v293
        %v295 = vrot.slane %v242, %v294
        %vm296 = vcmp.eq.s32.totalorder %v287, %v291
        %vm297 = vcmp.eq.s32.totalorder %v287, %v295
        %v299 = vcombine.high %v266, %v266
        %v301 = vsel %vm296, %v266, 0.0
        %v302 = vsel %vm297, %v299, 0.0
        %v303 = vsel %vm247, %v301, 0.0
        %v304 = vrot.slane %v303, 4
        %v305 = vadd.f32 %v303, %v304
        %v306 = vrot.slane %v305, 2
        %v307 = vadd.f32 %v305, %v306
        %v308 = vrot.slane %v307, 1
        %v309 = vadd.f32 %v307, %v308
        %v310 = vsel %vm247, %v302, 0.0
        %v311 = vrot.slane %v310, 4
        %v312 = vadd.f32 %v310, %v311
        %v313 = vrot.slane %v312, 2
        %v314 = vadd.f32 %v312, %v313
        %v315 = vrot.slane %v314, 1
        %v316 = vadd.f32 %v314, %v315
        %v317 = vlog2.pop %v278
        %v318 = vmul.f32 %v317, 0.6931472
        %v319 = vlog2.pop %v285
        %v320 = vmul.f32 %v319, 0.6931472
        %v321 = vsub.f32 %v318, %v309
        %v322 = vsub.f32 %v320, %v316
        %vm323 = vcmp.ne.s32.totalorder %v242, 255
        %v326 = vcombine.low %v321, %v322
        %v328 = vunpack.c.l.s4 1966171168
        %v329 = vunpack.c.0.s8 %v328
        %v330 = vlaneseq
        %v331 = vshrl.u32 %v330, 7
        %v332 = vsub.s32 %v329, %v331
        %v333 = vrot.slane %v326, %v332
        %v335 = vunpack.c.l.s4 1966171168
        %v336 = vunpack.c.0.s8 %v335
        %v337 = vlaneseq
        %v338 = vshrl.u32 %v337, 7
        %v339 = vsub.s32 %v336, %v338
        %v340 = vrot.slane %v333, %v339
        %v342 = vsel %vm323, %v340, 0.0
        %v343 = vsel %vm323, 1, 0
        %v344 = vcvt.s32.f32 %v343
        %v346 = vlaneseq
        %v347 = vshrl.u32 %v346, 7
        %v348 = vsub.s32 0, %v347
        %v349 = vrot.slane %v342, %v348
        %v350 = vlaneseq
        %v351 = vshrl.u32 %v350, 7
        %v352 = vsub.s32 1, %v351
        %v353 = vrot.slane %v342, %v352
        %v357 = vlaneseq
        %v358 = vshrl.u32 %v357, 7
        %v359 = vsub.s32 0, %v358
        %v360 = vrot.slane %v344, %v359
        %v361 = vlaneseq
        %v362 = vshrl.u32 %v361, 7
        %v363 = vsub.s32 1, %v362
        %v364 = vrot.slane %v344, %v363
        %vm367 = vcmask 1040384
        %v368 = vsel %vm367, %v349, %v360
        %v369 = vsel %vm367, %v353, %v364
        %v370 = vld [vmem:[%s232] sm:$0xf]
        %v373 = vcombine.low %v368, %v369
        %v375 = vunpack.c.l.s4 1983009808
        %v376 = vunpack.c.0.s8 %v375
        %v377 = vlaneseq
        %v378 = vshrl.u32 %v377, 7
        %v379 = vsub.s32 %v376, %v378
        %v380 = vrot.slane %v373, %v379
        %v382 = vadd.f32 %v370, %v380
        %383 = vst [vmem:[%s232] sm:$0xf] %v382
        %s384 = sand.u32 %s111, 1
        %s385 = scalar_lea.sflag [#allocation4], %s384
        %s386 = sand.u32 %s111, 1
        %s387 = smul.addr %s386, 4
        %s388 = scalar_lea.vmem [#allocation7], %s387
        // Predicated region
        $region41: #{tpu_custom_call.1} parent=27 // pred_check
          %p389 = pneg %p121
        $region42: #{tpu_custom_call.1} parent=27 // pred_check_branch
          %391 = sbr.rel (%p389) target = $region44
        $region43: #{tpu_custom_call.1} parent=27 // pred_region
          %s393 = ssub.s32 64, 64
          %394 = vsyncadd %s385, %s393
          %s395 = smul.addr %s28, 2
          %s396 = smul.addr %s27, 2
          %s397 = sadd.s32 %s395, %s396
          %s398 = smul.addr %s397, 32
          %s399 = scalar_lea.hbm %s2, %s398
          %s401 = sshll.u32 %s388, 4
          %s402 = int_to_ptr.vmem [resolvable:$true] %s401
          %404 = dma.vmem_to_hbm [thread:$0]  %s402, 64, %s399, %s385
        $region44: #{tpu_custom_call.1} parent=27 // pred_fallthru
          _
      $region28: #{tpu_custom_call.1} parent=5 // pred_fallthru
        _
      %p405 = scmp.le.s32.totalorder 2, %s17
      // Predicated region
      $region45: #{tpu_custom_call.1} parent=5 // pred_check
        %p406 = pneg %p405
      $region46: #{tpu_custom_call.1} parent=5 // pred_check_branch
        %408 = sbr.rel (%p406) target = $region48
      $region47: #{tpu_custom_call.1} parent=5 // pred_region
        %s409 = ssub.s32 %s17, 2
        // Predicated region
        $region49: #{tpu_custom_call.1} parent=47 // pred_check
          %p410 = pneg %p127
        $region50: #{tpu_custom_call.1} parent=47 // pred_check_branch
          %412 = sbr.rel (%p410) target = $region52
        $region51: #{tpu_custom_call.1} parent=47 // pred_region
          %s413 = sand.u32 %s112, 1
          %s414 = scalar_lea.sflag [#allocation4], %s413
          %s415 = sand.u32 %s112, 1
          %s416 = smul.addr %s415, 4
          %s417 = scalar_lea.vmem [#allocation7], %s416
          %418 = dma.done %s414, 64
        $region52: #{tpu_custom_call.1} parent=47 // pred_fallthru
          _
      $region48: #{tpu_custom_call.1} parent=5 // pred_fallthru
        _
    $region6: #{tpu_custom_call.1} parent=1 // loop_footer
      %s21 = sadd.s32 1, %s17
    $region7: #{tpu_custom_call.1} parent=1 // loop_footer_branch
      %16 = sbr.rel target = $region3
    $region8: #{tpu_custom_call.1} parent=1 // loop_exit
      _
    %419 = vsyncpa [#allocation3], 1
    %s420 = scalar_lea.sflag [#allocation3], 1
    %421 = vsyncpa %s420, 1
    %422 = vsyncpa [#allocation6], 1
    %s423 = scalar_lea.sflag [#allocation6], 1
    %424 = vsyncpa %s423, 1
    %425 = vsyncpa [#allocation4], 1
    %s426 = scalar_lea.sflag [#allocation4], 1
    %427 = vsyncpa %s426, 1

</llo_original>
